<compile_context>
chip_gen: v6e
topology: v6e:2x2x1
jax: 0.10.0
libtpu: 0.0.40
codegen_flags: <defaults>
</compile_context>

<pallas_src>
import jax
import jax.numpy as jnp
from jax.experimental import pallas as pl
from jax.experimental.pallas import tpu as pltpu

LANES = 128
SUBLANES = 8
ALIGN_ROWS = 16                      # keeps bf16 (16,128) tiles legal too
ALIGN_ELEMS = ALIGN_ROWS * LANES     # 2048 elements


def _gen_defaults():
    """Generation-tuned (block_rows, num_splits)."""
    kind = ""
    try:
        kind = jax.devices()[0].device_kind.lower()
    except Exception:
        pass
    if "v7" in kind:
        return 4096, 2   # megacore: shard the reduction across both TCs
    if "v6" in kind:
        return 4096, 1   # 24 MiB of 3-buffered inputs < 32 MiB scoped default
    if "v5" in kind:
        return 2048, 1   # 12 MiB of 3-buffered inputs < 16 MiB scoped default
    return 2048, 1       # unknown: conservative


def _make_kernel(block_rows, blocks_per_split, valid_rows, needs_mask,
                 chunk_rows):
    n_chunks = block_rows // chunk_rows

    def kernel(pl_ref, ll_ref, pr_ref, lr_ref, o_ref, acc_ref):
        blk = pl.program_id(1)

        # Zero the resident (8,128) accumulator at the start of each split's
        # reduction sweep.
        @pl.when(blk == 0)
        def _():
            acc_ref[...] = jnp.zeros_like(acc_ref)

        split = pl.program_id(0)
        # Logical (unclamped) global row offset of this block.  Phantom tail
        # blocks clamp their *data* index in the index_map but keep row0 past
        # valid_rows, so their re-read contribution masks to zero.
        row0 = (split * blocks_per_split + blk) * block_rows

        def accumulate(base, cr):
            # (cr,128) slices, cast to f32 in vregs, FMA; no full-block temps.
            a = pl_ref[pl.ds(base, cr), :].astype(jnp.float32)
            b = ll_ref[pl.ds(base, cr), :].astype(jnp.float32)
            c = pr_ref[pl.ds(base, cr), :].astype(jnp.float32)
            d = lr_ref[pl.ds(base, cr), :].astype(jnp.float32)
            fused = a * b + c * d
            if needs_mask:
                rid = jax.lax.broadcasted_iota(jnp.int32, (cr, LANES), 0)
                fused = jnp.where(rid + (row0 + base) < valid_rows,
                                  fused, 0.0)
            # Fold (cr,128) -> (8,128): pure vreg-wise VALU adds, no XLU.
            acc_ref[...] += fused.reshape(
                cr // SUBLANES, SUBLANES, LANES).sum(axis=0)

        if n_chunks <= 1:
            accumulate(0, block_rows)
        else:
            def body(i, carry):
                base = pl.multiple_of(i * chunk_rows, chunk_rows)
                accumulate(base, chunk_rows)
                return carry
            jax.lax.fori_loop(0, n_chunks, body, 0,
                              unroll=min(4, n_chunks))

        # Single lane-dense (8,128) store per split, on its last block only.
        @pl.when(blk == pl.num_programs(1) - 1)
        def _():
            o_ref[...] = acc_ref[...]

    return kernel


def split_node_loss(prob_left, loss_left, prob_right, loss_right,
                    *, block_rows=None, num_splits=None):
    assert (prob_left.shape == loss_left.shape ==
            prob_right.shape == loss_right.shape)

    def_br, def_ns = _gen_defaults()
    if block_rows is None:
        block_rows = def_br
    if num_splits is None:
        num_splits = def_ns
    block_rows = max(ALIGN_ROWS, (block_rows // ALIGN_ROWS) * ALIGN_ROWS)

    flats = [x.reshape(-1)
             for x in (prob_left, loss_left, prob_right, loss_right)]
    n = flats[0].shape[0]

    # Main region: largest multiple of 2048 elements (no pad, no copy in the
    # aligned case).  The tiny tail is summed in plain JAX.
    main_n = (n // ALIGN_ELEMS) * ALIGN_ELEMS
    tail = jnp.float32(0.0)
    if main_n != n:
        ta, tb, tc, td = (f[main_n:].astype(jnp.float32) for f in flats)
        tail = jnp.sum(ta * tb + tc * td)
    if main_n == 0:
        return tail

    slabs = [f[:main_n].reshape(-1, LANES) for f in flats]
    rows = main_n // LANES                   # multiple of 16

    # Block sizing: big blocks for bandwidth; collapse to a single full-array
    # block for small inputs.
    br = min(block_rows, rows)
    nbt = pl.cdiv(rows, br)                  # total real blocks
    ns = max(1, min(num_splits, nbt))        # reduction splits (2 on v7x)
    bps = pl.cdiv(nbt, ns)                   # blocks per reduction split
    needs_mask = (ns * bps * br) != rows     # static: off in the exact case

    # Inner chunk size: bounds vreg/VMEM live ranges inside a block.
    chunk_rows = br
    for c in (256, 128, 64, 32, 16):
        if br > c and br % c == 0:
            chunk_rows = c
            break

    def in_map(s, b):
        g = s * bps + b
        # Phantom tail blocks are clamped onto a valid block; their (re-read)
        # contribution is masked to zero inside the kernel.
        return (jnp.minimum(g, nbt - 1), 0)

    spec_kwargs = {}
    if bps >= 3:
        # Hide the per-step bubble behind an extra in-flight DMA.
        spec_kwargs["pipeline_mode"] = pl.Buffered(3)
    in_spec = pl.BlockSpec((br, LANES), in_map, **spec_kwargs)
    out_spec = pl.BlockSpec((SUBLANES, LANES), lambda s, b: (s, 0))

    kernel = _make_kernel(br, bps, rows, needs_mask, chunk_rows)

    in_bytes = sum(int(s.size) * s.dtype.itemsize for s in slabs)
    cost = pl.CostEstimate(
        flops=3 * main_n, transcendentals=0,
        bytes_accessed=in_bytes + ns * SUBLANES * LANES * 4)

    partial = pl.pallas_call(
        kernel,
        out_shape=jax.ShapeDtypeStruct((ns * SUBLANES, LANES), jnp.float32),
        grid_spec=pltpu.PrefetchScalarGridSpec(
            num_scalar_prefetch=0,
            grid=(ns, bps),
            in_specs=[in_spec, in_spec, in_spec, in_spec],
            out_specs=out_spec,
            scratch_shapes=[pltpu.VMEM((SUBLANES, LANES), jnp.float32)],
        ),
        compiler_params=pltpu.CompilerParams(
            dimension_semantics=("parallel", "arbitrary"),
        ),
        cost_estimate=cost,
    )(*slabs)

    # One tiny cross-lane reduce of the per-split (8,128) partials.
    total = jnp.sum(partial)
    if main_n != n:
        total = total + tail
    return total


if __name__ == "__main__":
    key = jax.random.PRNGKey(0)
    k1, k2, k3, k4 = jax.random.split(key, 4)

    shape = (2, 4, 16, 16)  # small NCHW-like example shape (2048 elements)
    prob_left = jax.random.uniform(k1, shape, dtype=jnp.float32)
    loss_left = jax.random.normal(k2, shape, dtype=jnp.float32)
    prob_right = jax.random.uniform(k3, shape, dtype=jnp.float32)
    loss_right = jax.random.normal(k4, shape, dtype=jnp.float32)

    result = split_node_loss(prob_left, loss_left, prob_right, loss_right)
    result = jax.block_until_ready(result)

    # Reference check (plain JAX), mirrors the PyTorch forward exactly.
    ref = jnp.sum(prob_left * loss_left + prob_right * loss_right)
    assert jnp.allclose(result, ref, rtol=1e-5, atol=1e-5), (result, ref)

    print("KERNEL_OK")
</pallas_src>

<mosaic_0001>
module attributes {stable_mosaic.version = 11 : i64} {
  func.func @kernel(%arg0: i32, %arg1: i32, %arg2: memref<16x128xf32, #tpu.memory_space<vmem>>, %arg3: memref<16x128xf32, #tpu.memory_space<vmem>>, %arg4: memref<16x128xf32, #tpu.memory_space<vmem>>, %arg5: memref<16x128xf32, #tpu.memory_space<vmem>>, %arg6: memref<8x128xf32, #tpu.memory_space<vmem>>, %arg7: memref<8x128xf32, #tpu.memory_space<vmem>>) attributes {dimension_semantics = [#tpu.dimension_semantics<parallel>, #tpu.dimension_semantics<arbitrary>], iteration_bounds = array<i64: 1, 1>, scalar_prefetch = 0 : i64, scratch_operands = 1 : i64, tpu.core_type = #tpu.core_type<tc>, window_params = [{transform_indices = @transform_0, window_bounds = array<i64: 16, 128>}, {transform_indices = @transform_1, window_bounds = array<i64: 16, 128>}, {transform_indices = @transform_2, window_bounds = array<i64: 16, 128>}, {transform_indices = @transform_3, window_bounds = array<i64: 16, 128>}, {transform_indices = @transform_4, window_bounds = array<i64: 8, 128>}]} {
    %c0_i32 = arith.constant 0 : i32
    %0 = arith.cmpi eq, %arg1, %c0_i32 : i32
    %1 = arith.extui %0 : i1 to i32
    %c0_i32_0 = arith.constant 0 : i32
    %2 = arith.cmpi ne, %1, %c0_i32_0 : i32
    scf.if %2 {
      %cst_14 = arith.constant 0.000000e+00 : f32
      %18 = vector.broadcast %cst_14 : f32 to vector<8x128xf32>
      %c0_15 = arith.constant 0 : index
      %c0_16 = arith.constant 0 : index
      %19 = vector.load %arg7[%c0_15, %c0_16] : memref<8x128xf32, #tpu.memory_space<vmem>>, vector<8x128xf32>
      tpu.vector_store %arg7[%c0_15, %c0_16], %18 {strides = array<i32>} : memref<8x128xf32, #tpu.memory_space<vmem>>, vector<8x128xf32>,
    } else {
    }
    %c0 = arith.constant 0 : index
    %c0_1 = arith.constant 0 : index
    %3 = vector.load %arg2[%c0, %c0_1] : memref<16x128xf32, #tpu.memory_space<vmem>>, vector<16x128xf32>
    %c0_2 = arith.constant 0 : index
    %c0_3 = arith.constant 0 : index
    %4 = vector.load %arg3[%c0_2, %c0_3] : memref<16x128xf32, #tpu.memory_space<vmem>>, vector<16x128xf32>
    %c0_4 = arith.constant 0 : index
    %c0_5 = arith.constant 0 : index
    %5 = vector.load %arg4[%c0_4, %c0_5] : memref<16x128xf32, #tpu.memory_space<vmem>>, vector<16x128xf32>
    %c0_6 = arith.constant 0 : index
    %c0_7 = arith.constant 0 : index
    %6 = vector.load %arg5[%c0_6, %c0_7] : memref<16x128xf32, #tpu.memory_space<vmem>>, vector<16x128xf32>
    %7 = arith.mulf %3, %4 : vector<16x128xf32>
    %8 = arith.mulf %5, %6 : vector<16x128xf32>
    %9 = arith.addf %7, %8 : vector<16x128xf32>
    %c0_8 = arith.constant 0 : index
    %c0_9 = arith.constant 0 : index
    %10 = vector.load %arg7[%c0_8, %c0_9] : memref<8x128xf32, #tpu.memory_space<vmem>>, vector<8x128xf32>
    %11 = vector.shape_cast %9 : vector<16x128xf32> to vector<2x8x128xf32>
    %cst = arith.constant dense<0.000000e+00> : vector<8x128xf32>
    %12 = vector.multi_reduction <add>, %11, %cst [0] : vector<2x8x128xf32> to vector<8x128xf32>
    %13 = arith.addf %10, %12 : vector<8x128xf32>
    %c0_10 = arith.constant 0 : index
    %c0_11 = arith.constant 0 : index
    %14 = vector.load %arg7[%c0_10, %c0_11] : memref<8x128xf32, #tpu.memory_space<vmem>>, vector<8x128xf32>
    tpu.vector_store %arg7[%c0_10, %c0_11], %13 {strides = array<i32>} : memref<8x128xf32, #tpu.memory_space<vmem>>, vector<8x128xf32>,
    %c0_i32_12 = arith.constant 0 : i32
    %15 = arith.cmpi eq, %arg1, %c0_i32_12 : i32
    %16 = arith.extui %15 : i1 to i32
    %c0_i32_13 = arith.constant 0 : i32
    %17 = arith.cmpi ne, %16, %c0_i32_13 : i32
    scf.if %17 {
      %c0_14 = arith.constant 0 : index
      %c0_15 = arith.constant 0 : index
      %18 = vector.load %arg7[%c0_14, %c0_15] : memref<8x128xf32, #tpu.memory_space<vmem>>, vector<8x128xf32>
      %c0_16 = arith.constant 0 : index
      %c0_17 = arith.constant 0 : index
      %19 = vector.load %arg6[%c0_16, %c0_17] : memref<8x128xf32, #tpu.memory_space<vmem>>, vector<8x128xf32>
      tpu.vector_store %arg6[%c0_16, %c0_17], %18 {strides = array<i32>} : memref<8x128xf32, #tpu.memory_space<vmem>>, vector<8x128xf32>,
    } else {
    }
    return
  }
  func.func @transform_0(%arg0: i32, %arg1: i32) -> (i32, i32) {
    %c1_i32 = arith.constant 1 : i32
    %0 = arith.muli %arg0, %c1_i32 : i32
    %1 = arith.addi %0, %arg1 : i32
    %c0_i32 = arith.constant 0 : i32
    %2 = arith.minsi %1, %c0_i32 : i32
    %c0_i32_0 = arith.constant 0 : i32
    %c0_i32_1 = arith.constant 0 : i32
    return %2, %c0_i32_0 : i32, i32
  }
  func.func @transform_1(%arg0: i32, %arg1: i32) -> (i32, i32) {
    %c1_i32 = arith.constant 1 : i32
    %0 = arith.muli %arg0, %c1_i32 : i32
    %1 = arith.addi %0, %arg1 : i32
    %c0_i32 = arith.constant 0 : i32
    %2 = arith.minsi %1, %c0_i32 : i32
    %c0_i32_0 = arith.constant 0 : i32
    %c0_i32_1 = arith.constant 0 : i32
    return %2, %c0_i32_0 : i32, i32
  }
  func.func @transform_2(%arg0: i32, %arg1: i32) -> (i32, i32) {
    %c1_i32 = arith.constant 1 : i32
    %0 = arith.muli %arg0, %c1_i32 : i32
    %1 = arith.addi %0, %arg1 : i32
    %c0_i32 = arith.constant 0 : i32
    %2 = arith.minsi %1, %c0_i32 : i32
    %c0_i32_0 = arith.constant 0 : i32
    %c0_i32_1 = arith.constant 0 : i32
    return %2, %c0_i32_0 : i32, i32
  }
  func.func @transform_3(%arg0: i32, %arg1: i32) -> (i32, i32) {
    %c1_i32 = arith.constant 1 : i32
    %0 = arith.muli %arg0, %c1_i32 : i32
    %1 = arith.addi %0, %arg1 : i32
    %c0_i32 = arith.constant 0 : i32
    %2 = arith.minsi %1, %c0_i32 : i32
    %c0_i32_0 = arith.constant 0 : i32
    %c0_i32_1 = arith.constant 0 : i32
    return %2, %c0_i32_0 : i32, i32
  }
  func.func @transform_4(%arg0: i32, %arg1: i32) -> (i32, i32) {
    %c0_i32 = arith.constant 0 : i32
    %c0_i32_0 = arith.constant 0 : i32
    return %arg0, %c0_i32 : i32, i32
  }
}

</mosaic_0001>

<llo_original>
// kernel: tpu_custom_call.1
$region0: #{tpu_custom_call.1}
  #allocation0 [shape = 'u32[]', space=smem, size = 0x4, offset = 0x4, fixed_abs, tag = 'smem constant byte address 0x4 - core index']
  #allocation1 [shape = 'u32[144,128]{1,0:T(1,128)}', space=vmem, size = 0x12000, scoped, tag = 'internal scratch']
  #allocation2 [shape = 'f32[8,128]{1,0:T(8,128)}', space=vmem, size = 0x1000, scoped, tag = 'scratch operand']
  %s0 = inlined_call_operand.hbm [shape: f32[16,128], index: 0, kind: input, shape index: {}]
  %s1 = inlined_call_operand.hbm [shape: f32[16,128], index: 1, kind: input, shape index: {}]
  %s2 = inlined_call_operand.hbm [shape: f32[16,128], index: 2, kind: input, shape index: {}]
  %s3 = inlined_call_operand.hbm [shape: f32[16,128], index: 3, kind: input, shape index: {}]
  %s4 = inlined_call_operand.hbm [shape: f32[8,128], index: 4, kind: output, shape index: {}]
  %s5 = sld [smem:[#allocation0]]
  $region50: #{tpu_custom_call.1} parent=0
    _
  %s7 = ssub.s32 1, %s5
  %s8 = scalar_select 0, %s7, %s5
  $region1: #{tpu_custom_call.1} parent=0
    #allocation3 [shape = 'u8[8192]{0}', space=vmem, size = 0x2000, scoped, tag = 'input window, operand 0, single buffered']
    #allocation4 [shape = 's32[1]{0}', space=sflag, size = 0x4, scoped, tag = 'scoped memory for tpu_custom_call.1']
    #allocation5 [shape = 's32[1]{0}', space=sflag, size = 0x4, scoped, tag = 'scoped memory for tpu_custom_call.1']
    #allocation6 [shape = 'u8[8192]{0}', space=vmem, size = 0x2000, scoped, tag = 'input window, operand 1, single buffered']
    #allocation7 [shape = 's32[1]{0}', space=sflag, size = 0x4, scoped, tag = 'scoped memory for tpu_custom_call.1']
    #allocation8 [shape = 'u8[8192]{0}', space=vmem, size = 0x2000, scoped, tag = 'input window, operand 2, single buffered']
    #allocation9 [shape = 'u8[8192]{0}', space=vmem, size = 0x2000, scoped, tag = 'input window, operand 3, single buffered']
    #allocation10 [shape = 's32[1]{0}', space=sflag, size = 0x4, scoped, tag = 'scoped memory for tpu_custom_call.1']
    #allocation11 [shape = 'u8[4096]{0}', space=vmem, size = 0x1000, scoped, tag = 'output window, operand 0, single buffered']
    %9 = vsyncpa [#allocation4], 0
    %10 = vsyncpa [#allocation7], 0
    %11 = vsyncpa [#allocation10], 0
    %12 = vsyncpa [#allocation5], 0
    // Predicated region
    $region2: #{tpu_custom_call.1} parent=1 // pred_check
      _
    $region3: #{tpu_custom_call.1} parent=1 // pred_check_branch
      %14 = sbr.rel (0) target = $region5
    $region4: #{tpu_custom_call.1} parent=1 // pred_region
      %s15 = sadd.s32 0, 0
      %p16 = scmp.lt.s32.totalorder %s15, 0
      %s17 = scalar_select %p16, %s15, 0
      %s18 = smul.u32 2, %s17
      %s20 = ssub.s32 256, 256
      %21 = vsyncadd [#allocation4], %s20
      %s22 = smul.addr %s18, 128
      %s23 = scalar_lea.hbm %s0, %s22
      %s24 = sshll.u32 [#allocation3], 4
      %s25 = int_to_ptr.vmem [resolvable:$true] %s24
      %30 = dma.hbm_to_vmem [thread:$0]  %s23, 256, %s25, [#allocation4], 128, 128, 8
    $region5: #{tpu_custom_call.1} parent=1 // pred_fallthru
      _
    // Predicated region
    $region6: #{tpu_custom_call.1} parent=1 // pred_check
      _
    $region7: #{tpu_custom_call.1} parent=1 // pred_check_branch
      %32 = sbr.rel (0) target = $region9
    $region8: #{tpu_custom_call.1} parent=1 // pred_region
      %s33 = sadd.s32 0, 0
      %p34 = scmp.lt.s32.totalorder %s33, 0
      %s35 = scalar_select %p34, %s33, 0
      %s36 = smul.u32 2, %s35
      %s38 = ssub.s32 256, 256
      %39 = vsyncadd [#allocation7], %s38
      %s40 = smul.addr %s36, 128
      %s41 = scalar_lea.hbm %s1, %s40
      %s42 = sshll.u32 [#allocation6], 4
      %s43 = int_to_ptr.vmem [resolvable:$true] %s42
      %48 = dma.hbm_to_vmem [thread:$0]  %s41, 256, %s43, [#allocation7], 128, 128, 8
    $region9: #{tpu_custom_call.1} parent=1 // pred_fallthru
      _
    // Predicated region
    $region10: #{tpu_custom_call.1} parent=1 // pred_check
      _
    $region11: #{tpu_custom_call.1} parent=1 // pred_check_branch
      %50 = sbr.rel (0) target = $region13
    $region12: #{tpu_custom_call.1} parent=1 // pred_region
      %s51 = sadd.s32 0, 0
      %p52 = scmp.lt.s32.totalorder %s51, 0
      %s53 = scalar_select %p52, %s51, 0
      %s54 = smul.u32 2, %s53
      %s56 = ssub.s32 256, 256
      %57 = vsyncadd [#allocation7], %s56
      %s58 = smul.addr %s54, 128
      %s59 = scalar_lea.hbm %s2, %s58
      %s60 = sshll.u32 [#allocation8], 4
      %s61 = int_to_ptr.vmem [resolvable:$true] %s60
      %66 = dma.hbm_to_vmem [thread:$0]  %s59, 256, %s61, [#allocation7], 128, 128, 8
    $region13: #{tpu_custom_call.1} parent=1 // pred_fallthru
      _
    // Predicated region
    $region14: #{tpu_custom_call.1} parent=1 // pred_check
      _
    $region15: #{tpu_custom_call.1} parent=1 // pred_check_branch
      %68 = sbr.rel (0) target = $region17
    $region16: #{tpu_custom_call.1} parent=1 // pred_region
      %s69 = sadd.s32 0, 0
      %p70 = scmp.lt.s32.totalorder %s69, 0
      %s71 = scalar_select %p70, %s69, 0
      %s72 = smul.u32 2, %s71
      %s74 = ssub.s32 256, 256
      %75 = vsyncadd [#allocation10], %s74
      %s76 = smul.addr %s72, 128
      %s77 = scalar_lea.hbm %s3, %s76
      %s78 = sshll.u32 [#allocation9], 4
      %s79 = int_to_ptr.vmem [resolvable:$true] %s78
      %84 = dma.hbm_to_vmem [thread:$0]  %s77, 256, %s79, [#allocation10], 128, 128, 8
    $region17: #{tpu_custom_call.1} parent=1 // pred_fallthru
      _
    // Predicated region
    $region18: #{tpu_custom_call.1} parent=1 // pred_check
      _
    $region19: #{tpu_custom_call.1} parent=1 // pred_check_branch
      %86 = sbr.rel (0) target = $region21
    $region20: #{tpu_custom_call.1} parent=1 // pred_region
      %87 = dma.done [#allocation4], 256
    $region21: #{tpu_custom_call.1} parent=1 // pred_fallthru
      _
    // Predicated region
    $region22: #{tpu_custom_call.1} parent=1 // pred_check
      _
    $region23: #{tpu_custom_call.1} parent=1 // pred_check_branch
      %89 = sbr.rel (0) target = $region25
    $region24: #{tpu_custom_call.1} parent=1 // pred_region
      %90 = dma.done [#allocation7], 256
    $region25: #{tpu_custom_call.1} parent=1 // pred_fallthru
      _
    // Predicated region
    $region26: #{tpu_custom_call.1} parent=1 // pred_check
      _
    $region27: #{tpu_custom_call.1} parent=1 // pred_check_branch
      %92 = sbr.rel (0) target = $region29
    $region28: #{tpu_custom_call.1} parent=1 // pred_region
      %93 = dma.done [#allocation7], 256
    $region29: #{tpu_custom_call.1} parent=1 // pred_fallthru
      _
    // Predicated region
    $region30: #{tpu_custom_call.1} parent=1 // pred_check
      _
    $region31: #{tpu_custom_call.1} parent=1 // pred_check_branch
      %95 = sbr.rel (0) target = $region33
    $region32: #{tpu_custom_call.1} parent=1 // pred_region
      %96 = dma.done [#allocation10], 256
    $region33: #{tpu_custom_call.1} parent=1 // pred_fallthru
      _
    %s97 = sadd.s32 0, 0
    %p98 = scmp.lt.s32.totalorder %s97, 0
    %s99 = scalar_select %p98, %s97, 0
    %s100 = smul.u32 2, %s99
    %s101 = sadd.s32 0, 0
    %p102 = scmp.lt.s32.totalorder %s101, 0
    %s103 = scalar_select %p102, %s101, 0
    %s104 = smul.u32 2, %s103
    %s105 = sadd.s32 0, 0
    %p106 = scmp.lt.s32.totalorder %s105, 0
    %s107 = scalar_select %p106, %s105, 0
    %s108 = smul.u32 2, %s107
    %s109 = sadd.s32 0, 0
    %p110 = scmp.lt.s32.totalorder %s109, 0
    %s111 = scalar_select %p110, %s109, 0
    %s112 = smul.u32 2, %s111
    %p113 = scmp.eq.s32.totalorder 0, 0
    // Predicated region
    $region34: #{tpu_custom_call.1} parent=1 // pred_check
      %p114 = pneg %p113
    $region35: #{tpu_custom_call.1} parent=1 // pred_check_branch
      %116 = sbr.rel (%p114) target = $region37
    $region36: #{tpu_custom_call.1} parent=1 // pred_region
      %117 = vst [vmem:[#allocation2] sm:$0xff] 0.0
    $region37: #{tpu_custom_call.1} parent=1 // pred_fallthru
      _
    %v118 = vld [vmem:[#allocation3] sm:$0xff]
    %v119 = vld [vmem:[#allocation3 + $0x8] sm:$0xff]
    %v120 = vld [vmem:[#allocation6] sm:$0xff]
    %v121 = vld [vmem:[#allocation6 + $0x8] sm:$0xff]
    %v122 = vld [vmem:[#allocation8] sm:$0xff]
    %v123 = vld [vmem:[#allocation8 + $0x8] sm:$0xff]
    %v124 = vld [vmem:[#allocation9] sm:$0xff]
    %v125 = vld [vmem:[#allocation9 + $0x8] sm:$0xff]
    %v126 = vmul.f32 %v118, %v120
    %v127 = vmul.f32 %v119, %v121
    %v128 = vmul.f32 %v122, %v124
    %v129 = vmul.f32 %v123, %v125
    %v130 = vadd.f32 %v126, %v128
    %v131 = vadd.f32 %v127, %v129
    %v132 = vld [vmem:[#allocation2] sm:$0xff]
    %v133 = vadd.f32 %v130, %v131
    %v134 = vadd.f32 %v132, %v133
    %135 = vst [vmem:[#allocation2] sm:$0xff] %v134
    // Predicated region
    $region38: #{tpu_custom_call.1} parent=1 // pred_check
      %p136 = pneg %p113
    $region39: #{tpu_custom_call.1} parent=1 // pred_check_branch
      %138 = sbr.rel (%p136) target = $region41
    $region40: #{tpu_custom_call.1} parent=1 // pred_region
      %v139 = vld [vmem:[#allocation2] sm:$0xff]
      %140 = vst [vmem:[#allocation11] sm:$0xff] %v139
    $region41: #{tpu_custom_call.1} parent=1 // pred_fallthru
      _
    // Predicated region
    $region42: #{tpu_custom_call.1} parent=1 // pred_check
      _
    $region43: #{tpu_custom_call.1} parent=1 // pred_check_branch
      %142 = sbr.rel (0) target = $region45
    $region44: #{tpu_custom_call.1} parent=1 // pred_region
      %s144 = ssub.s32 128, 128
      %145 = vsyncadd [#allocation5], %s144
      %s147 = sshll.u32 [#allocation11], 4
      %s148 = int_to_ptr.vmem [resolvable:$true] %s147
      %150 = dma.vmem_to_hbm [thread:$0]  %s148, 128, %s4, [#allocation5]
    $region45: #{tpu_custom_call.1} parent=1 // pred_fallthru
      _
    // Predicated region
    $region46: #{tpu_custom_call.1} parent=1 // pred_check
      _
    $region47: #{tpu_custom_call.1} parent=1 // pred_check_branch
      %152 = sbr.rel (0) target = $region49
    $region48: #{tpu_custom_call.1} parent=1 // pred_region
      %153 = dma.done [#allocation5], 128
    $region49: #{tpu_custom_call.1} parent=1 // pred_fallthru
      _
    %154 = vsyncpa [#allocation4], 1
    %155 = vsyncpa [#allocation7], 1
    %156 = vsyncpa [#allocation10], 1
    %157 = vsyncpa [#allocation5], 1

</llo_original>
